<compile_context>
chip_gen: v7x
topology: tpu7x:2x2x1
jax: 0.10.0
libtpu: 0.0.40
codegen_flags: <defaults>
</compile_context>

<pallas_src>
import functools

import numpy as np
import jax
import jax.numpy as jnp
from jax.experimental import pallas as pl
from jax.experimental.pallas import tpu as pltpu


def _get_kernel_size_and_padding(input_size, one_kernel_per_feature=True):
    # mirrors GaborFilter.get_kernel_size_and_padding
    if one_kernel_per_feature:
        offset = (input_size + 1) % 2
        nk = input_size + offset
        pad = (input_size - input_size - 1 + nk) // 2
    else:
        nk = input_size
        pad = 0
    return nk, pad


def compute_gabor_kernels(frequency, mu, kernel_support, nk, bw_constant):
    """Plain-JAX glue mirroring GaborFilter.compute_kernel (tiny C x nk elementwise)."""
    two_pi = 2.0 * np.pi
    freq = jax.nn.sigmoid(frequency) * (0.5 - 1.0 / nk) + 1.0 / nk   # (C,)
    mu_c = mu[:, None]                                               # (C, 1)
    freq_c = freq[:, None]                                           # (C, 1)
    sigma = bw_constant / freq_c
    centered = kernel_support[None, :] - mu_c                        # (C, nk)
    real_comp = jnp.cos(centered * freq_c * two_pi)
    imag_comp = jnp.sin(centered * freq_c * two_pi)
    exp_comp = jnp.exp(-jnp.square(centered / sigma) / 2.0)
    wr = jnp.flip(real_comp * exp_comp, axis=1)                      # flipped -> F.conv1d weight
    wi = jnp.flip(imag_comp * exp_comp, axis=1)
    return wr, wi


def _gabor_fused_kernel(x_ref, wr_ref, wi_ref, mag_ref, ori_ref, xpad_ref,
                        *, pad, n_taps, eps):
    """Fused hot path for one channel block.

    x_ref   : (B, T, CB)        input block, time on sublanes / channels on lanes
    wr/wi   : (nk, CB)          real / imag depthwise conv taps
    mag/ori : (B, T, CB)        batch-normalized outputs
    xpad_ref: (B, Tpad_al, CB)  VMEM scratch holding the zero-padded time slab
    """
    B, T, CB = x_ref.shape
    tpad_al = xpad_ref.shape[1]

    # ---- in-kernel halo: zero pad rows in VMEM instead of jnp.pad in HBM ----
    if pad > 0:
        xpad_ref[:, 0:pad, :] = jnp.zeros((B, pad, CB), jnp.float32)
    tail = tpad_al - (pad + T)
    if tail > 0:
        xpad_ref[:, pad + T:tpad_al, :] = jnp.zeros((B, tail, CB), jnp.float32)
    xpad_ref[:, pad:pad + T, :] = x_ref[...].astype(jnp.float32)

    # ---- depthwise complex conv: taps are sublane-offset loads, pure VPU FMAs ----
    # Weights are loaded ONCE and sliced per tap (hoisted out of the loop).
    wr = wr_ref[...].astype(jnp.float32)           # (nk, CB)
    wi = wi_ref[...].astype(jnp.float32)

    acc_r = jnp.zeros((B, T, CB), jnp.float32)
    acc_i = jnp.zeros((B, T, CB), jnp.float32)
    # Static unroll: nk is small (17).  For very large (B, T, CB) tiles switch to
    # lax.fori_loop(..., unroll=True) with a dynamic pl.ds tap slice to bound
    # vreg live ranges.
    for k in range(n_taps):
        xk = xpad_ref[:, k:k + T, :]               # sublane-shifted window, no lane rotates
        acc_r = acc_r + xk * wr[k, :]
        acc_i = acc_i + xk * wi[k, :]

    # ---- magnitude / orientation ----
    s = acc_r * acc_r + acc_i * acc_i
    # sqrt via s * rsqrt(s): the transcendental lands on the EUP slot.
    mag = s * jax.lax.rsqrt(jnp.maximum(s, 1e-30))
    ori = jnp.arctan2(acc_i, acc_r)
    # TODO(synk): a cheaper quadrant-corrected atan approximation (EUP reciprocal +
    # polynomial) would fit the 1e-2 orientation tolerance; kept exact arctan2 to
    # preserve the module's semantics.

    # ---- BatchNorm1d (training-mode batch stats), fused single pass ----
    # Per-channel mean/var over (batch, time); biased variance, gamma=1, beta=0.
    # NOTE: correct only because each block carries the FULL B and T extents.
    inv_n = 1.0 / float(B * T)

    def _bn(v):
        m1 = jnp.sum(v, axis=(0, 1), keepdims=True) * inv_n          # E[x]     (1,1,CB)
        m2 = jnp.sum(v * v, axis=(0, 1), keepdims=True) * inv_n      # E[x^2]   (1,1,CB)
        var = m2 - m1 * m1
        return (v - m1) * jax.lax.rsqrt(var + eps)

    mag_ref[...] = _bn(mag).astype(mag_ref.dtype)
    ori_ref[...] = _bn(ori).astype(ori_ref.dtype)


def _pick_channel_block(C, B, T, pad):
    """Channel (lane) block size.

    (8,128) rule: a lane-axis block must equal C or be a multiple of 128.
    For large C pick the biggest multiple-of-128 block whose working set
    (double-buffered in/out blocks + padded scratch + two f32 accumulators)
    stays well inside scoped VMEM; the budget is conservative enough for
    v7x's smaller (64 MiB) VMEM as well as v5e/v6e.
    """
    if C % 128 != 0:
        return C
    budget = 8 * 1024 * 1024
    per_128 = 4 * B * 128 * (6 * T + (T + 2 * pad) + 8)
    n_units = C // 128
    take = max(1, min(n_units, budget // max(per_128, 1)))
    while n_units % take:                   # keep the grid exact
        take -= 1
    return 128 * take


def gabor_filter_forward(data, frequency, mu, kernel_support, nk, pad, bw_constant):
    B, C, T = data.shape
    wr, wi = compute_gabor_kernels(frequency, mu, kernel_support, nk, bw_constant)  # (C, nk)

    # Layout plumbing only (no jnp.pad of the input): time -> sublanes, channels -> lanes.
    x_btc = jnp.transpose(data, (0, 2, 1))        # (B, T, C)
    wr_t = jnp.transpose(wr, (1, 0))              # (nk, C)
    wi_t = jnp.transpose(wi, (1, 0))

    cb = _pick_channel_block(C, B, T, pad)
    grid = (C // cb,)
    tpad_al = ((T + 2 * pad + 7) // 8) * 8        # sublane-aligned padded slab

    kern = functools.partial(_gabor_fused_kernel, pad=pad, n_taps=nk, eps=1e-5)

    mag_btc, ori_btc = pl.pallas_call(
        kern,
        out_shape=(jax.ShapeDtypeStruct((B, T, C), data.dtype),
                   jax.ShapeDtypeStruct((B, T, C), data.dtype)),
        grid_spec=pltpu.PrefetchScalarGridSpec(
            num_scalar_prefetch=0,
            grid=grid,
            in_specs=[
                pl.BlockSpec((B, T, cb), lambda i: (0, 0, i)),
                pl.BlockSpec((nk, cb), lambda i: (0, i)),
                pl.BlockSpec((nk, cb), lambda i: (0, i)),
            ],
            out_specs=[
                pl.BlockSpec((B, T, cb), lambda i: (0, 0, i)),
                pl.BlockSpec((B, T, cb), lambda i: (0, 0, i)),
            ],
            scratch_shapes=[pltpu.VMEM((B, tpad_al, cb), jnp.float32)],
        ),
        compiler_params=pltpu.CompilerParams(
            dimension_semantics=("parallel",)),   # channel blocks shard across TCs (v7x)
    )(x_btc, wr_t, wi_t)

    mag = jnp.transpose(mag_btc, (0, 2, 1))       # back to (B, C, T)
    ori = jnp.transpose(ori_btc, (0, 2, 1))
    return mag, ori


def reference_forward(data, wr, wi, pad):
    """Plain-JAX reference for sanity checking the Pallas kernel."""
    x_pad = jnp.pad(data, ((0, 0), (0, 0), (pad, pad)))
    T = data.shape[2]
    nk = wr.shape[1]
    idx = jnp.arange(T)[:, None] + jnp.arange(nk)[None, :]      # (T, nk)
    win = x_pad[:, :, idx]                                      # (B, C, T, nk)
    re = jnp.einsum('bctk,ck->bct', win, wr)
    im = jnp.einsum('bctk,ck->bct', win, wi)
    mag = jnp.sqrt(re * re + im * im)
    ori = jnp.arctan2(im, re)
    eps = 1e-5

    def bn(v):
        mean = jnp.mean(v, axis=(0, 2), keepdims=True)
        var = jnp.mean(jnp.square(v - mean), axis=(0, 2), keepdims=True)
        return (v - mean) / jnp.sqrt(var + eps)

    return bn(mag), bn(ori)


if __name__ == "__main__":
    # Small shapes consistent with the module: batch=2, no_features=4, input_time_len=16
    B, C, T = 2, 4, 16
    bandwidth = 2.5

    nk, pad = _get_kernel_size_and_padding(T, one_kernel_per_feature=True)   # nk=17, pad=8
    support_range = max(nk / 2, 6)
    two_df = 2.0 ** bandwidth
    bw_constant = float(np.sqrt(np.log(2) / np.pi) * (two_df + 1) / (two_df - 1))

    key = jax.random.PRNGKey(0)
    k_data, k_freq, k_mu = jax.random.split(key, 3)
    data = jax.random.normal(k_data, (B, C, T), dtype=jnp.float32)

    # Deterministic parameter init mirroring GaborFilter.init_params
    frequency = jax.random.normal(k_freq, (C,), dtype=jnp.float32) * 1.0 + 2.0
    mu = (jax.random.uniform(k_mu, (C,), dtype=jnp.float32) - 0.5) * 0.1 * support_range
    kernel_support = jnp.linspace(-support_range, support_range, nk, dtype=jnp.float32)

    mag, ori = jax.block_until_ready(
        gabor_filter_forward(data, frequency, mu, kernel_support, nk, pad, bw_constant))

    # sanity check against plain-JAX reference
    wr, wi = compute_gabor_kernels(frequency, mu, kernel_support, nk, bw_constant)
    mag_ref, ori_ref = reference_forward(data, wr, wi, pad)
    assert mag.shape == (B, C, T) and ori.shape == (B, C, T)
    assert np.all(np.isfinite(np.asarray(mag))) and np.all(np.isfinite(np.asarray(ori)))
    assert np.allclose(np.asarray(mag), np.asarray(mag_ref), atol=1e-4, rtol=1e-4)
    assert np.allclose(np.asarray(ori), np.asarray(ori_ref), atol=1e-2, rtol=1e-2)

    print("KERNEL_OK")
</pallas_src>

<mosaic_0001>
module attributes {stable_mosaic.version = 11 : i64} {
  func.func @_gabor_fused_kernel(%arg0: i32, %arg1: memref<2x16x4xf32, #tpu.memory_space<vmem>>, %arg2: memref<17x4xf32, #tpu.memory_space<vmem>>, %arg3: memref<17x4xf32, #tpu.memory_space<vmem>>, %arg4: memref<2x16x4xf32, #tpu.memory_space<vmem>>, %arg5: memref<2x16x4xf32, #tpu.memory_space<vmem>>, %arg6: memref<2x32x4xf32, #tpu.memory_space<vmem>>) attributes {dimension_semantics = [#tpu.dimension_semantics<parallel>], iteration_bounds = array<i64: 1>, scalar_prefetch = 0 : i64, scratch_operands = 1 : i64, tpu.core_type = #tpu.core_type<tc>, window_params = [{transform_indices = @transform_0, window_bounds = array<i64: 2, 16, 4>}, {transform_indices = @transform_1, window_bounds = array<i64: 17, 4>}, {transform_indices = @transform_2, window_bounds = array<i64: 17, 4>}, {transform_indices = @transform_3, window_bounds = array<i64: 2, 16, 4>}, {transform_indices = @transform_4, window_bounds = array<i64: 2, 16, 4>}]} {
    %cst = arith.constant 0.000000e+00 : f32
    %0 = vector.broadcast %cst : f32 to vector<2x8x4xf32>
    %c0 = arith.constant 0 : index
    %c0_0 = arith.constant 0 : index
    %c0_1 = arith.constant 0 : index
    %1 = vector.load %arg6[%c0, %c0_0, %c0_1] : memref<2x32x4xf32, #tpu.memory_space<vmem>>, vector<2x8x4xf32>
    tpu.vector_store %arg6[%c0, %c0_0, %c0_1], %0 {strides = array<i32>} : memref<2x32x4xf32, #tpu.memory_space<vmem>>, vector<2x8x4xf32>,
    %cst_2 = arith.constant 0.000000e+00 : f32
    %2 = vector.broadcast %cst_2 : f32 to vector<2x8x4xf32>
    %c0_3 = arith.constant 0 : index
    %c24 = arith.constant 24 : index
    %c0_4 = arith.constant 0 : index
    %3 = vector.load %arg6[%c0_3, %c24, %c0_4] : memref<2x32x4xf32, #tpu.memory_space<vmem>>, vector<2x8x4xf32>
    tpu.vector_store %arg6[%c0_3, %c24, %c0_4], %2 {strides = array<i32>} : memref<2x32x4xf32, #tpu.memory_space<vmem>>, vector<2x8x4xf32>,
    %c0_5 = arith.constant 0 : index
    %c0_6 = arith.constant 0 : index
    %c0_7 = arith.constant 0 : index
    %4 = vector.load %arg1[%c0_5, %c0_6, %c0_7] : memref<2x16x4xf32, #tpu.memory_space<vmem>>, vector<2x16x4xf32>
    %c0_8 = arith.constant 0 : index
    %c8 = arith.constant 8 : index
    %c0_9 = arith.constant 0 : index
    %5 = vector.load %arg6[%c0_8, %c8, %c0_9] : memref<2x32x4xf32, #tpu.memory_space<vmem>>, vector<2x16x4xf32>
    tpu.vector_store %arg6[%c0_8, %c8, %c0_9], %4 {strides = array<i32>} : memref<2x32x4xf32, #tpu.memory_space<vmem>>, vector<2x16x4xf32>,
    %c0_10 = arith.constant 0 : index
    %c0_11 = arith.constant 0 : index
    %6 = vector.load %arg2[%c0_10, %c0_11] : memref<17x4xf32, #tpu.memory_space<vmem>>, vector<17x4xf32>
    %c0_12 = arith.constant 0 : index
    %c0_13 = arith.constant 0 : index
    %7 = vector.load %arg3[%c0_12, %c0_13] : memref<17x4xf32, #tpu.memory_space<vmem>>, vector<17x4xf32>
    %cst_14 = arith.constant 0.000000e+00 : f32
    %8 = vector.broadcast %cst_14 : f32 to vector<2x16x4xf32>
    %cst_15 = arith.constant 0.000000e+00 : f32
    %9 = vector.broadcast %cst_15 : f32 to vector<2x16x4xf32>
    %c0_16 = arith.constant 0 : index
    %c0_17 = arith.constant 0 : index
    %c0_18 = arith.constant 0 : index
    %10 = vector.load %arg6[%c0_16, %c0_17, %c0_18] : memref<2x32x4xf32, #tpu.memory_space<vmem>>, vector<2x16x4xf32>
    %11 = vector.extract_strided_slice %6 {offsets = [0, 0], sizes = [1, 4], strides = [1, 1]} : vector<17x4xf32> to vector<1x4xf32>
    %12 = vector.shape_cast %11 : vector<1x4xf32> to vector<4xf32>
    %13 = vector.shape_cast %12 : vector<4xf32> to vector<1x1x4xf32>
    %14 = vector.broadcast %13 : vector<1x1x4xf32> to vector<2x16x4xf32>
    %15 = arith.mulf %10, %14 : vector<2x16x4xf32>
    %16 = arith.addf %8, %15 : vector<2x16x4xf32>
    %17 = vector.extract_strided_slice %7 {offsets = [0, 0], sizes = [1, 4], strides = [1, 1]} : vector<17x4xf32> to vector<1x4xf32>
    %18 = vector.shape_cast %17 : vector<1x4xf32> to vector<4xf32>
    %19 = vector.shape_cast %18 : vector<4xf32> to vector<1x1x4xf32>
    %20 = vector.broadcast %19 : vector<1x1x4xf32> to vector<2x16x4xf32>
    %21 = arith.mulf %10, %20 : vector<2x16x4xf32>
    %22 = arith.addf %9, %21 : vector<2x16x4xf32>
    %c0_19 = arith.constant 0 : index
    %c1 = arith.constant 1 : index
    %c0_20 = arith.constant 0 : index
    %23 = vector.load %arg6[%c0_19, %c1, %c0_20] : memref<2x32x4xf32, #tpu.memory_space<vmem>>, vector<2x16x4xf32>
    %24 = vector.extract_strided_slice %6 {offsets = [1, 0], sizes = [1, 4], strides = [1, 1]} : vector<17x4xf32> to vector<1x4xf32>
    %25 = vector.shape_cast %24 : vector<1x4xf32> to vector<4xf32>
    %26 = vector.shape_cast %25 : vector<4xf32> to vector<1x1x4xf32>
    %27 = vector.broadcast %26 : vector<1x1x4xf32> to vector<2x16x4xf32>
    %28 = arith.mulf %23, %27 : vector<2x16x4xf32>
    %29 = arith.addf %16, %28 : vector<2x16x4xf32>
    %30 = vector.extract_strided_slice %7 {offsets = [1, 0], sizes = [1, 4], strides = [1, 1]} : vector<17x4xf32> to vector<1x4xf32>
    %31 = vector.shape_cast %30 : vector<1x4xf32> to vector<4xf32>
    %32 = vector.shape_cast %31 : vector<4xf32> to vector<1x1x4xf32>
    %33 = vector.broadcast %32 : vector<1x1x4xf32> to vector<2x16x4xf32>
    %34 = arith.mulf %23, %33 : vector<2x16x4xf32>
    %35 = arith.addf %22, %34 : vector<2x16x4xf32>
    %c0_21 = arith.constant 0 : index
    %c2 = arith.constant 2 : index
    %c0_22 = arith.constant 0 : index
    %36 = vector.load %arg6[%c0_21, %c2, %c0_22] : memref<2x32x4xf32, #tpu.memory_space<vmem>>, vector<2x16x4xf32>
    %37 = vector.extract_strided_slice %6 {offsets = [2, 0], sizes = [1, 4], strides = [1, 1]} : vector<17x4xf32> to vector<1x4xf32>
    %38 = vector.shape_cast %37 : vector<1x4xf32> to vector<4xf32>
    %39 = vector.shape_cast %38 : vector<4xf32> to vector<1x1x4xf32>
    %40 = vector.broadcast %39 : vector<1x1x4xf32> to vector<2x16x4xf32>
    %41 = arith.mulf %36, %40 : vector<2x16x4xf32>
    %42 = arith.addf %29, %41 : vector<2x16x4xf32>
    %43 = vector.extract_strided_slice %7 {offsets = [2, 0], sizes = [1, 4], strides = [1, 1]} : vector<17x4xf32> to vector<1x4xf32>
    %44 = vector.shape_cast %43 : vector<1x4xf32> to vector<4xf32>
    %45 = vector.shape_cast %44 : vector<4xf32> to vector<1x1x4xf32>
    %46 = vector.broadcast %45 : vector<1x1x4xf32> to vector<2x16x4xf32>
    %47 = arith.mulf %36, %46 : vector<2x16x4xf32>
    %48 = arith.addf %35, %47 : vector<2x16x4xf32>
    %c0_23 = arith.constant 0 : index
    %c3 = arith.constant 3 : index
    %c0_24 = arith.constant 0 : index
    %49 = vector.load %arg6[%c0_23, %c3, %c0_24] : memref<2x32x4xf32, #tpu.memory_space<vmem>>, vector<2x16x4xf32>
    %50 = vector.extract_strided_slice %6 {offsets = [3, 0], sizes = [1, 4], strides = [1, 1]} : vector<17x4xf32> to vector<1x4xf32>
    %51 = vector.shape_cast %50 : vector<1x4xf32> to vector<4xf32>
    %52 = vector.shape_cast %51 : vector<4xf32> to vector<1x1x4xf32>
    %53 = vector.broadcast %52 : vector<1x1x4xf32> to vector<2x16x4xf32>
    %54 = arith.mulf %49, %53 : vector<2x16x4xf32>
    %55 = arith.addf %42, %54 : vector<2x16x4xf32>
    %56 = vector.extract_strided_slice %7 {offsets = [3, 0], sizes = [1, 4], strides = [1, 1]} : vector<17x4xf32> to vector<1x4xf32>
    %57 = vector.shape_cast %56 : vector<1x4xf32> to vector<4xf32>
    %58 = vector.shape_cast %57 : vector<4xf32> to vector<1x1x4xf32>
    %59 = vector.broadcast %58 : vector<1x1x4xf32> to vector<2x16x4xf32>
    %60 = arith.mulf %49, %59 : vector<2x16x4xf32>
    %61 = arith.addf %48, %60 : vector<2x16x4xf32>
    %c0_25 = arith.constant 0 : index
    %c4 = arith.constant 4 : index
    %c0_26 = arith.constant 0 : index
    %62 = vector.load %arg6[%c0_25, %c4, %c0_26] : memref<2x32x4xf32, #tpu.memory_space<vmem>>, vector<2x16x4xf32>
    %63 = vector.extract_strided_slice %6 {offsets = [4, 0], sizes = [1, 4], strides = [1, 1]} : vector<17x4xf32> to vector<1x4xf32>
    %64 = vector.shape_cast %63 : vector<1x4xf32> to vector<4xf32>
    %65 = vector.shape_cast %64 : vector<4xf32> to vector<1x1x4xf32>
    %66 = vector.broadcast %65 : vector<1x1x4xf32> to vector<2x16x4xf32>
    %67 = arith.mulf %62, %66 : vector<2x16x4xf32>
    %68 = arith.addf %55, %67 : vector<2x16x4xf32>
    %69 = vector.extract_strided_slice %7 {offsets = [4, 0], sizes = [1, 4], strides = [1, 1]} : vector<17x4xf32> to vector<1x4xf32>
    %70 = vector.shape_cast %69 : vector<1x4xf32> to vector<4xf32>
    %71 = vector.shape_cast %70 : vector<4xf32> to vector<1x1x4xf32>
    %72 = vector.broadcast %71 : vector<1x1x4xf32> to vector<2x16x4xf32>
    %73 = arith.mulf %62, %72 : vector<2x16x4xf32>
    %74 = arith.addf %61, %73 : vector<2x16x4xf32>
    %c0_27 = arith.constant 0 : index
    %c5 = arith.constant 5 : index
    %c0_28 = arith.constant 0 : index
    %75 = vector.load %arg6[%c0_27, %c5, %c0_28] : memref<2x32x4xf32, #tpu.memory_space<vmem>>, vector<2x16x4xf32>
    %76 = vector.extract_strided_slice %6 {offsets = [5, 0], sizes = [1, 4], strides = [1, 1]} : vector<17x4xf32> to vector<1x4xf32>
    %77 = vector.shape_cast %76 : vector<1x4xf32> to vector<4xf32>
    %78 = vector.shape_cast %77 : vector<4xf32> to vector<1x1x4xf32>
    %79 = vector.broadcast %78 : vector<1x1x4xf32> to vector<2x16x4xf32>
    %80 = arith.mulf %75, %79 : vector<2x16x4xf32>
    %81 = arith.addf %68, %80 : vector<2x16x4xf32>
    %82 = vector.extract_strided_slice %7 {offsets = [5, 0], sizes = [1, 4], strides = [1, 1]} : vector<17x4xf32> to vector<1x4xf32>
    %83 = vector.shape_cast %82 : vector<1x4xf32> to vector<4xf32>
    %84 = vector.shape_cast %83 : vector<4xf32> to vector<1x1x4xf32>
    %85 = vector.broadcast %84 : vector<1x1x4xf32> to vector<2x16x4xf32>
    %86 = arith.mulf %75, %85 : vector<2x16x4xf32>
    %87 = arith.addf %74, %86 : vector<2x16x4xf32>
    %c0_29 = arith.constant 0 : index
    %c6 = arith.constant 6 : index
    %c0_30 = arith.constant 0 : index
    %88 = vector.load %arg6[%c0_29, %c6, %c0_30] : memref<2x32x4xf32, #tpu.memory_space<vmem>>, vector<2x16x4xf32>
    %89 = vector.extract_strided_slice %6 {offsets = [6, 0], sizes = [1, 4], strides = [1, 1]} : vector<17x4xf32> to vector<1x4xf32>
    %90 = vector.shape_cast %89 : vector<1x4xf32> to vector<4xf32>
    %91 = vector.shape_cast %90 : vector<4xf32> to vector<1x1x4xf32>
    %92 = vector.broadcast %91 : vector<1x1x4xf32> to vector<2x16x4xf32>
    %93 = arith.mulf %88, %92 : vector<2x16x4xf32>
    %94 = arith.addf %81, %93 : vector<2x16x4xf32>
    %95 = vector.extract_strided_slice %7 {offsets = [6, 0], sizes = [1, 4], strides = [1, 1]} : vector<17x4xf32> to vector<1x4xf32>
    %96 = vector.shape_cast %95 : vector<1x4xf32> to vector<4xf32>
    %97 = vector.shape_cast %96 : vector<4xf32> to vector<1x1x4xf32>
    %98 = vector.broadcast %97 : vector<1x1x4xf32> to vector<2x16x4xf32>
    %99 = arith.mulf %88, %98 : vector<2x16x4xf32>
    %100 = arith.addf %87, %99 : vector<2x16x4xf32>
    %c0_31 = arith.constant 0 : index
    %c7 = arith.constant 7 : index
    %c0_32 = arith.constant 0 : index
    %101 = vector.load %arg6[%c0_31, %c7, %c0_32] : memref<2x32x4xf32, #tpu.memory_space<vmem>>, vector<2x16x4xf32>
    %102 = vector.extract_strided_slice %6 {offsets = [7, 0], sizes = [1, 4], strides = [1, 1]} : vector<17x4xf32> to vector<1x4xf32>
    %103 = vector.shape_cast %102 : vector<1x4xf32> to vector<4xf32>
    %104 = vector.shape_cast %103 : vector<4xf32> to vector<1x1x4xf32>
    %105 = vector.broadcast %104 : vector<1x1x4xf32> to vector<2x16x4xf32>
    %106 = arith.mulf %101, %105 : vector<2x16x4xf32>
    %107 = arith.addf %94, %106 : vector<2x16x4xf32>
    %108 = vector.extract_strided_slice %7 {offsets = [7, 0], sizes = [1, 4], strides = [1, 1]} : vector<17x4xf32> to vector<1x4xf32>
    %109 = vector.shape_cast %108 : vector<1x4xf32> to vector<4xf32>
    %110 = vector.shape_cast %109 : vector<4xf32> to vector<1x1x4xf32>
    %111 = vector.broadcast %110 : vector<1x1x4xf32> to vector<2x16x4xf32>
    %112 = arith.mulf %101, %111 : vector<2x16x4xf32>
    %113 = arith.addf %100, %112 : vector<2x16x4xf32>
    %c0_33 = arith.constant 0 : index
    %c8_34 = arith.constant 8 : index
    %c0_35 = arith.constant 0 : index
    %114 = vector.load %arg6[%c0_33, %c8_34, %c0_35] : memref<2x32x4xf32, #tpu.memory_space<vmem>>, vector<2x16x4xf32>
    %115 = vector.extract_strided_slice %6 {offsets = [8, 0], sizes = [1, 4], strides = [1, 1]} : vector<17x4xf32> to vector<1x4xf32>
    %116 = vector.shape_cast %115 : vector<1x4xf32> to vector<4xf32>
    %117 = vector.shape_cast %116 : vector<4xf32> to vector<1x1x4xf32>
    %118 = vector.broadcast %117 : vector<1x1x4xf32> to vector<2x16x4xf32>
    %119 = arith.mulf %114, %118 : vector<2x16x4xf32>
    %120 = arith.addf %107, %119 : vector<2x16x4xf32>
    %121 = vector.extract_strided_slice %7 {offsets = [8, 0], sizes = [1, 4], strides = [1, 1]} : vector<17x4xf32> to vector<1x4xf32>
    %122 = vector.shape_cast %121 : vector<1x4xf32> to vector<4xf32>
    %123 = vector.shape_cast %122 : vector<4xf32> to vector<1x1x4xf32>
    %124 = vector.broadcast %123 : vector<1x1x4xf32> to vector<2x16x4xf32>
    %125 = arith.mulf %114, %124 : vector<2x16x4xf32>
    %126 = arith.addf %113, %125 : vector<2x16x4xf32>
    %c0_36 = arith.constant 0 : index
    %c9 = arith.constant 9 : index
    %c0_37 = arith.constant 0 : index
    %127 = vector.load %arg6[%c0_36, %c9, %c0_37] : memref<2x32x4xf32, #tpu.memory_space<vmem>>, vector<2x16x4xf32>
    %128 = vector.extract_strided_slice %6 {offsets = [9, 0], sizes = [1, 4], strides = [1, 1]} : vector<17x4xf32> to vector<1x4xf32>
    %129 = vector.shape_cast %128 : vector<1x4xf32> to vector<4xf32>
    %130 = vector.shape_cast %129 : vector<4xf32> to vector<1x1x4xf32>
    %131 = vector.broadcast %130 : vector<1x1x4xf32> to vector<2x16x4xf32>
    %132 = arith.mulf %127, %131 : vector<2x16x4xf32>
    %133 = arith.addf %120, %132 : vector<2x16x4xf32>
    %134 = vector.extract_strided_slice %7 {offsets = [9, 0], sizes = [1, 4], strides = [1, 1]} : vector<17x4xf32> to vector<1x4xf32>
    %135 = vector.shape_cast %134 : vector<1x4xf32> to vector<4xf32>
    %136 = vector.shape_cast %135 : vector<4xf32> to vector<1x1x4xf32>
    %137 = vector.broadcast %136 : vector<1x1x4xf32> to vector<2x16x4xf32>
    %138 = arith.mulf %127, %137 : vector<2x16x4xf32>
    %139 = arith.addf %126, %138 : vector<2x16x4xf32>
    %c0_38 = arith.constant 0 : index
    %c10 = arith.constant 10 : index
    %c0_39 = arith.constant 0 : index
    %140 = vector.load %arg6[%c0_38, %c10, %c0_39] : memref<2x32x4xf32, #tpu.memory_space<vmem>>, vector<2x16x4xf32>
    %141 = vector.extract_strided_slice %6 {offsets = [10, 0], sizes = [1, 4], strides = [1, 1]} : vector<17x4xf32> to vector<1x4xf32>
    %142 = vector.shape_cast %141 : vector<1x4xf32> to vector<4xf32>
    %143 = vector.shape_cast %142 : vector<4xf32> to vector<1x1x4xf32>
    %144 = vector.broadcast %143 : vector<1x1x4xf32> to vector<2x16x4xf32>
    %145 = arith.mulf %140, %144 : vector<2x16x4xf32>
    %146 = arith.addf %133, %145 : vector<2x16x4xf32>
    %147 = vector.extract_strided_slice %7 {offsets = [10, 0], sizes = [1, 4], strides = [1, 1]} : vector<17x4xf32> to vector<1x4xf32>
    %148 = vector.shape_cast %147 : vector<1x4xf32> to vector<4xf32>
    %149 = vector.shape_cast %148 : vector<4xf32> to vector<1x1x4xf32>
    %150 = vector.broadcast %149 : vector<1x1x4xf32> to vector<2x16x4xf32>
    %151 = arith.mulf %140, %150 : vector<2x16x4xf32>
    %152 = arith.addf %139, %151 : vector<2x16x4xf32>
    %c0_40 = arith.constant 0 : index
    %c11 = arith.constant 11 : index
    %c0_41 = arith.constant 0 : index
    %153 = vector.load %arg6[%c0_40, %c11, %c0_41] : memref<2x32x4xf32, #tpu.memory_space<vmem>>, vector<2x16x4xf32>
    %154 = vector.extract_strided_slice %6 {offsets = [11, 0], sizes = [1, 4], strides = [1, 1]} : vector<17x4xf32> to vector<1x4xf32>
    %155 = vector.shape_cast %154 : vector<1x4xf32> to vector<4xf32>
    %156 = vector.shape_cast %155 : vector<4xf32> to vector<1x1x4xf32>
    %157 = vector.broadcast %156 : vector<1x1x4xf32> to vector<2x16x4xf32>
    %158 = arith.mulf %153, %157 : vector<2x16x4xf32>
    %159 = arith.addf %146, %158 : vector<2x16x4xf32>
    %160 = vector.extract_strided_slice %7 {offsets = [11, 0], sizes = [1, 4], strides = [1, 1]} : vector<17x4xf32> to vector<1x4xf32>
    %161 = vector.shape_cast %160 : vector<1x4xf32> to vector<4xf32>
    %162 = vector.shape_cast %161 : vector<4xf32> to vector<1x1x4xf32>
    %163 = vector.broadcast %162 : vector<1x1x4xf32> to vector<2x16x4xf32>
    %164 = arith.mulf %153, %163 : vector<2x16x4xf32>
    %165 = arith.addf %152, %164 : vector<2x16x4xf32>
    %c0_42 = arith.constant 0 : index
    %c12 = arith.constant 12 : index
    %c0_43 = arith.constant 0 : index
    %166 = vector.load %arg6[%c0_42, %c12, %c0_43] : memref<2x32x4xf32, #tpu.memory_space<vmem>>, vector<2x16x4xf32>
    %167 = vector.extract_strided_slice %6 {offsets = [12, 0], sizes = [1, 4], strides = [1, 1]} : vector<17x4xf32> to vector<1x4xf32>
    %168 = vector.shape_cast %167 : vector<1x4xf32> to vector<4xf32>
    %169 = vector.shape_cast %168 : vector<4xf32> to vector<1x1x4xf32>
    %170 = vector.broadcast %169 : vector<1x1x4xf32> to vector<2x16x4xf32>
    %171 = arith.mulf %166, %170 : vector<2x16x4xf32>
    %172 = arith.addf %159, %171 : vector<2x16x4xf32>
    %173 = vector.extract_strided_slice %7 {offsets = [12, 0], sizes = [1, 4], strides = [1, 1]} : vector<17x4xf32> to vector<1x4xf32>
    %174 = vector.shape_cast %173 : vector<1x4xf32> to vector<4xf32>
    %175 = vector.shape_cast %174 : vector<4xf32> to vector<1x1x4xf32>
    %176 = vector.broadcast %175 : vector<1x1x4xf32> to vector<2x16x4xf32>
    %177 = arith.mulf %166, %176 : vector<2x16x4xf32>
    %178 = arith.addf %165, %177 : vector<2x16x4xf32>
    %c0_44 = arith.constant 0 : index
    %c13 = arith.constant 13 : index
    %c0_45 = arith.constant 0 : index
    %179 = vector.load %arg6[%c0_44, %c13, %c0_45] : memref<2x32x4xf32, #tpu.memory_space<vmem>>, vector<2x16x4xf32>
    %180 = vector.extract_strided_slice %6 {offsets = [13, 0], sizes = [1, 4], strides = [1, 1]} : vector<17x4xf32> to vector<1x4xf32>
    %181 = vector.shape_cast %180 : vector<1x4xf32> to vector<4xf32>
    %182 = vector.shape_cast %181 : vector<4xf32> to vector<1x1x4xf32>
    %183 = vector.broadcast %182 : vector<1x1x4xf32> to vector<2x16x4xf32>
    %184 = arith.mulf %179, %183 : vector<2x16x4xf32>
    %185 = arith.addf %172, %184 : vector<2x16x4xf32>
    %186 = vector.extract_strided_slice %7 {offsets = [13, 0], sizes = [1, 4], strides = [1, 1]} : vector<17x4xf32> to vector<1x4xf32>
    %187 = vector.shape_cast %186 : vector<1x4xf32> to vector<4xf32>
    %188 = vector.shape_cast %187 : vector<4xf32> to vector<1x1x4xf32>
    %189 = vector.broadcast %188 : vector<1x1x4xf32> to vector<2x16x4xf32>
    %190 = arith.mulf %179, %189 : vector<2x16x4xf32>
    %191 = arith.addf %178, %190 : vector<2x16x4xf32>
    %c0_46 = arith.constant 0 : index
    %c14 = arith.constant 14 : index
    %c0_47 = arith.constant 0 : index
    %192 = vector.load %arg6[%c0_46, %c14, %c0_47] : memref<2x32x4xf32, #tpu.memory_space<vmem>>, vector<2x16x4xf32>
    %193 = vector.extract_strided_slice %6 {offsets = [14, 0], sizes = [1, 4], strides = [1, 1]} : vector<17x4xf32> to vector<1x4xf32>
    %194 = vector.shape_cast %193 : vector<1x4xf32> to vector<4xf32>
    %195 = vector.shape_cast %194 : vector<4xf32> to vector<1x1x4xf32>
    %196 = vector.broadcast %195 : vector<1x1x4xf32> to vector<2x16x4xf32>
    %197 = arith.mulf %192, %196 : vector<2x16x4xf32>
    %198 = arith.addf %185, %197 : vector<2x16x4xf32>
    %199 = vector.extract_strided_slice %7 {offsets = [14, 0], sizes = [1, 4], strides = [1, 1]} : vector<17x4xf32> to vector<1x4xf32>
    %200 = vector.shape_cast %199 : vector<1x4xf32> to vector<4xf32>
    %201 = vector.shape_cast %200 : vector<4xf32> to vector<1x1x4xf32>
    %202 = vector.broadcast %201 : vector<1x1x4xf32> to vector<2x16x4xf32>
    %203 = arith.mulf %192, %202 : vector<2x16x4xf32>
    %204 = arith.addf %191, %203 : vector<2x16x4xf32>
    %c0_48 = arith.constant 0 : index
    %c15 = arith.constant 15 : index
    %c0_49 = arith.constant 0 : index
    %205 = vector.load %arg6[%c0_48, %c15, %c0_49] : memref<2x32x4xf32, #tpu.memory_space<vmem>>, vector<2x16x4xf32>
    %206 = vector.extract_strided_slice %6 {offsets = [15, 0], sizes = [1, 4], strides = [1, 1]} : vector<17x4xf32> to vector<1x4xf32>
    %207 = vector.shape_cast %206 : vector<1x4xf32> to vector<4xf32>
    %208 = vector.shape_cast %207 : vector<4xf32> to vector<1x1x4xf32>
    %209 = vector.broadcast %208 : vector<1x1x4xf32> to vector<2x16x4xf32>
    %210 = arith.mulf %205, %209 : vector<2x16x4xf32>
    %211 = arith.addf %198, %210 : vector<2x16x4xf32>
    %212 = vector.extract_strided_slice %7 {offsets = [15, 0], sizes = [1, 4], strides = [1, 1]} : vector<17x4xf32> to vector<1x4xf32>
    %213 = vector.shape_cast %212 : vector<1x4xf32> to vector<4xf32>
    %214 = vector.shape_cast %213 : vector<4xf32> to vector<1x1x4xf32>
    %215 = vector.broadcast %214 : vector<1x1x4xf32> to vector<2x16x4xf32>
    %216 = arith.mulf %205, %215 : vector<2x16x4xf32>
    %217 = arith.addf %204, %216 : vector<2x16x4xf32>
    %c0_50 = arith.constant 0 : index
    %c16 = arith.constant 16 : index
    %c0_51 = arith.constant 0 : index
    %218 = vector.load %arg6[%c0_50, %c16, %c0_51] : memref<2x32x4xf32, #tpu.memory_space<vmem>>, vector<2x16x4xf32>
    %219 = vector.extract_strided_slice %6 {offsets = [16, 0], sizes = [1, 4], strides = [1, 1]} : vector<17x4xf32> to vector<1x4xf32>
    %220 = vector.shape_cast %219 : vector<1x4xf32> to vector<4xf32>
    %221 = vector.shape_cast %220 : vector<4xf32> to vector<1x1x4xf32>
    %222 = vector.broadcast %221 : vector<1x1x4xf32> to vector<2x16x4xf32>
    %223 = arith.mulf %218, %222 : vector<2x16x4xf32>
    %224 = arith.addf %211, %223 : vector<2x16x4xf32>
    %225 = vector.extract_strided_slice %7 {offsets = [16, 0], sizes = [1, 4], strides = [1, 1]} : vector<17x4xf32> to vector<1x4xf32>
    %226 = vector.shape_cast %225 : vector<1x4xf32> to vector<4xf32>
    %227 = vector.shape_cast %226 : vector<4xf32> to vector<1x1x4xf32>
    %228 = vector.broadcast %227 : vector<1x1x4xf32> to vector<2x16x4xf32>
    %229 = arith.mulf %218, %228 : vector<2x16x4xf32>
    %230 = arith.addf %217, %229 : vector<2x16x4xf32>
    %231 = arith.mulf %224, %224 : vector<2x16x4xf32>
    %232 = arith.mulf %230, %230 : vector<2x16x4xf32>
    %233 = arith.addf %231, %232 : vector<2x16x4xf32>
    %cst_52 = arith.constant 1.000000e-30 : f32
    %234 = vector.broadcast %cst_52 : f32 to vector<2x16x4xf32>
    %235 = arith.maximumf %233, %234 : vector<2x16x4xf32>
    %236 = math.rsqrt %235 : vector<2x16x4xf32>
    %237 = arith.mulf %233, %236 : vector<2x16x4xf32>
    %238 = math.atan2 %230, %224 : vector<2x16x4xf32>
    %cst_53 = arith.constant dense<0.000000e+00> : vector<4xf32>
    %239 = vector.multi_reduction <add>, %237, %cst_53 [0, 1] : vector<2x16x4xf32> to vector<4xf32>
    %240 = vector.shape_cast %239 : vector<4xf32> to vector<1x1x4xf32>
    %cst_54 = arith.constant 3.125000e-02 : f32
    %241 = vector.broadcast %cst_54 : f32 to vector<1x1x4xf32>
    %242 = arith.mulf %240, %241 : vector<1x1x4xf32>
    %243 = arith.mulf %237, %237 : vector<2x16x4xf32>
    %cst_55 = arith.constant dense<0.000000e+00> : vector<4xf32>
    %244 = vector.multi_reduction <add>, %243, %cst_55 [0, 1] : vector<2x16x4xf32> to vector<4xf32>
    %245 = vector.shape_cast %244 : vector<4xf32> to vector<1x1x4xf32>
    %cst_56 = arith.constant 3.125000e-02 : f32
    %246 = vector.broadcast %cst_56 : f32 to vector<1x1x4xf32>
    %247 = arith.mulf %245, %246 : vector<1x1x4xf32>
    %248 = arith.mulf %242, %242 : vector<1x1x4xf32>
    %249 = arith.subf %247, %248 : vector<1x1x4xf32>
    %250 = vector.broadcast %242 : vector<1x1x4xf32> to vector<2x16x4xf32>
    %251 = arith.subf %237, %250 : vector<2x16x4xf32>
    %cst_57 = arith.constant 9.99999974E-6 : f32
    %252 = vector.broadcast %cst_57 : f32 to vector<1x1x4xf32>
    %253 = arith.addf %249, %252 : vector<1x1x4xf32>
    %254 = math.rsqrt %253 : vector<1x1x4xf32>
    %255 = vector.broadcast %254 : vector<1x1x4xf32> to vector<2x16x4xf32>
    %256 = arith.mulf %251, %255 : vector<2x16x4xf32>
    %c0_58 = arith.constant 0 : index
    %c0_59 = arith.constant 0 : index
    %c0_60 = arith.constant 0 : index
    %257 = vector.load %arg4[%c0_58, %c0_59, %c0_60] : memref<2x16x4xf32, #tpu.memory_space<vmem>>, vector<2x16x4xf32>
    tpu.vector_store %arg4[%c0_58, %c0_59, %c0_60], %256 {strides = array<i32>} : memref<2x16x4xf32, #tpu.memory_space<vmem>>, vector<2x16x4xf32>,
    %cst_61 = arith.constant dense<0.000000e+00> : vector<4xf32>
    %258 = vector.multi_reduction <add>, %238, %cst_61 [0, 1] : vector<2x16x4xf32> to vector<4xf32>
    %259 = vector.shape_cast %258 : vector<4xf32> to vector<1x1x4xf32>
    %cst_62 = arith.constant 3.125000e-02 : f32
    %260 = vector.broadcast %cst_62 : f32 to vector<1x1x4xf32>
    %261 = arith.mulf %259, %260 : vector<1x1x4xf32>
    %262 = arith.mulf %238, %238 : vector<2x16x4xf32>
    %cst_63 = arith.constant dense<0.000000e+00> : vector<4xf32>
    %263 = vector.multi_reduction <add>, %262, %cst_63 [0, 1] : vector<2x16x4xf32> to vector<4xf32>
    %264 = vector.shape_cast %263 : vector<4xf32> to vector<1x1x4xf32>
    %cst_64 = arith.constant 3.125000e-02 : f32
    %265 = vector.broadcast %cst_64 : f32 to vector<1x1x4xf32>
    %266 = arith.mulf %264, %265 : vector<1x1x4xf32>
    %267 = arith.mulf %261, %261 : vector<1x1x4xf32>
    %268 = arith.subf %266, %267 : vector<1x1x4xf32>
    %269 = vector.broadcast %261 : vector<1x1x4xf32> to vector<2x16x4xf32>
    %270 = arith.subf %238, %269 : vector<2x16x4xf32>
    %cst_65 = arith.constant 9.99999974E-6 : f32
    %271 = vector.broadcast %cst_65 : f32 to vector<1x1x4xf32>
    %272 = arith.addf %268, %271 : vector<1x1x4xf32>
    %273 = math.rsqrt %272 : vector<1x1x4xf32>
    %274 = vector.broadcast %273 : vector<1x1x4xf32> to vector<2x16x4xf32>
    %275 = arith.mulf %270, %274 : vector<2x16x4xf32>
    %c0_66 = arith.constant 0 : index
    %c0_67 = arith.constant 0 : index
    %c0_68 = arith.constant 0 : index
    %276 = vector.load %arg5[%c0_66, %c0_67, %c0_68] : memref<2x16x4xf32, #tpu.memory_space<vmem>>, vector<2x16x4xf32>
    tpu.vector_store %arg5[%c0_66, %c0_67, %c0_68], %275 {strides = array<i32>} : memref<2x16x4xf32, #tpu.memory_space<vmem>>, vector<2x16x4xf32>,
    return
  }
  func.func @transform_0(%arg0: i32) -> (i32, i32, i32) {
    %c0_i32 = arith.constant 0 : i32
    %c0_i32_0 = arith.constant 0 : i32
    %c0_i32_1 = arith.constant 0 : i32
    return %c0_i32, %c0_i32_0, %arg0 : i32, i32, i32
  }
  func.func @transform_1(%arg0: i32) -> (i32, i32) {
    %c0_i32 = arith.constant 0 : i32
    %c0_i32_0 = arith.constant 0 : i32
    return %c0_i32, %arg0 : i32, i32
  }
  func.func @transform_2(%arg0: i32) -> (i32, i32) {
    %c0_i32 = arith.constant 0 : i32
    %c0_i32_0 = arith.constant 0 : i32
    return %c0_i32, %arg0 : i32, i32
  }
  func.func @transform_3(%arg0: i32) -> (i32, i32, i32) {
    %c0_i32 = arith.constant 0 : i32
    %c0_i32_0 = arith.constant 0 : i32
    %c0_i32_1 = arith.constant 0 : i32
    return %c0_i32, %c0_i32_0, %arg0 : i32, i32, i32
  }
  func.func @transform_4(%arg0: i32) -> (i32, i32, i32) {
    %c0_i32 = arith.constant 0 : i32
    %c0_i32_0 = arith.constant 0 : i32
    %c0_i32_1 = arith.constant 0 : i32
    return %c0_i32, %c0_i32_0, %arg0 : i32, i32, i32
  }
}

</mosaic_0001>

<llo_original>
// kernel: tpu_custom_call.1
$region0: #{tpu_custom_call.1}
  #allocation0 [shape = 'u32[]', space=smem, size = 0x4, offset = 0x4, fixed_abs, tag = 'smem constant byte address 0x4 - core index']
  #allocation1 [shape = 'u32[144,128]{1,0:T(1,128)}', space=vmem, size = 0x12000, scoped, tag = 'internal scratch']
  #allocation2 [shape = 'f32[2,32,4]{2,1,0:T(8,128)}', space=vmem, size = 0x8000, scoped, tag = 'scratch operand']
  %s0 = inlined_call_operand.vmem [shape: f32[2,16,4], index: 0, kind: input, shape index: {}]
  %s1 = inlined_call_operand.vmem [shape: f32[17,4], index: 1, kind: input, shape index: {}]
  %s2 = inlined_call_operand.vmem [shape: f32[17,4], index: 2, kind: input, shape index: {}]
  %s3 = inlined_call_operand.vmem [shape: f32[2,16,4], index: 3, kind: output, shape index: {0}]
  %s4 = inlined_call_operand.vmem [shape: f32[2,16,4], index: 4, kind: output, shape index: {1}]
  %5 = xla_tuple %s3, %s4
  %s6 = sld [smem:[#allocation0]]
  $region30: #{tpu_custom_call.1} parent=0
    _
  %s8 = ssub.s32 1, %s6
  %s9 = scalar_select 0, %s8, %s6
  // Predicated region
  $region2: #{tpu_custom_call.1} parent=0 // pred_check
    _
  $region3: #{tpu_custom_call.1} parent=0 // pred_check_branch
    %11 = sbr.rel (0) target = $region5
  $region4: #{tpu_custom_call.1} parent=0 // pred_region
    _
  $region5: #{tpu_custom_call.1} parent=0 // pred_fallthru
    _
  // Predicated region
  $region6: #{tpu_custom_call.1} parent=0 // pred_check
    _
  $region7: #{tpu_custom_call.1} parent=0 // pred_check_branch
    %13 = sbr.rel (0) target = $region9
  $region8: #{tpu_custom_call.1} parent=0 // pred_region
    _
  $region9: #{tpu_custom_call.1} parent=0 // pred_fallthru
    _
  // Predicated region
  $region10: #{tpu_custom_call.1} parent=0 // pred_check
    _
  $region11: #{tpu_custom_call.1} parent=0 // pred_check_branch
    %15 = sbr.rel (0) target = $region13
  $region12: #{tpu_custom_call.1} parent=0 // pred_region
    _
  $region13: #{tpu_custom_call.1} parent=0 // pred_fallthru
    _
  %vm16 = vcmask 31744
  %17 = vst.msk [vmem:[#allocation2] sm:$0xff] %vm16, 0.0
  %18 = vst.msk [vmem:[#allocation2 + $0x20] sm:$0xff] %vm16, 0.0
  %19 = vst.msk [vmem:[#allocation2 + $0x18] sm:$0xff] %vm16, 0.0
  %20 = vst.msk [vmem:[#allocation2 + $0x38] sm:$0xff] %vm16, 0.0
  %v21 = vld [vmem:[%s0] sm:$0xff]
  %v22 = vld [vmem:[%s0 + $0x8] sm:$0xff]
  %v23 = vld [vmem:[%s0 + $0x10] sm:$0xff]
  %v24 = vld [vmem:[%s0 + $0x18] sm:$0xff]
  %25 = vst.msk [vmem:[#allocation2 + $0x8] sm:$0xff] %vm16, %v21
  %26 = vst.msk [vmem:[#allocation2 + $0x10] sm:$0xff] %vm16, %v22
  %27 = vst.msk [vmem:[#allocation2 + $0x28] sm:$0xff] %vm16, %v23
  %28 = vst.msk [vmem:[#allocation2 + $0x30] sm:$0xff] %vm16, %v24
  %v29 = vld [vmem:[%s1] sm:$0xff]
  %v30 = vld [vmem:[%s1 + $0x8] sm:$0xff]
  %v31 = vld [vmem:[%s1 + $0x10] sm:$0x1]
  %v32 = vld [vmem:[%s2] sm:$0xff]
  %v33 = vld [vmem:[%s2 + $0x8] sm:$0xff]
  %v34 = vld [vmem:[%s2 + $0x10] sm:$0x1]
  %v35 = vld [vmem:[#allocation2] sm:$0xff]
  %v36 = vld [vmem:[#allocation2 + $0x8] sm:$0xff]
  %v37 = vld [vmem:[#allocation2 + $0x20] sm:$0xff]
  %v38 = vld [vmem:[#allocation2 + $0x28] sm:$0xff]
  %v39 = vlaneseq
  %v40 = vshrl.u32 %v39, 7
  %v41 = vsub.s32 0, %v40
  %v42 = vrot.slane %v29, %v41
  %v43 = vmul.f32 %v35, %v42
  %v44 = vmul.f32 %v36, %v42
  %v45 = vmul.f32 %v37, %v42
  %v46 = vmul.f32 %v38, %v42
  %v47 = vadd.f32 %v43, 0.0
  %v48 = vadd.f32 %v44, 0.0
  %v49 = vadd.f32 %v45, 0.0
  %v50 = vadd.f32 %v46, 0.0
  %v51 = vlaneseq
  %v52 = vshrl.u32 %v51, 7
  %v53 = vsub.s32 0, %v52
  %v54 = vrot.slane %v32, %v53
  %v55 = vmul.f32 %v35, %v54
  %v56 = vmul.f32 %v36, %v54
  %v57 = vmul.f32 %v37, %v54
  %v58 = vmul.f32 %v38, %v54
  %v59 = vadd.f32 %v55, 0.0
  %v60 = vadd.f32 %v56, 0.0
  %v61 = vadd.f32 %v57, 0.0
  %v62 = vadd.f32 %v58, 0.0
  %v63 = vld [vmem:[#allocation2 + $0x1] sm:$0xff]
  %v64 = vld [vmem:[#allocation2 + $0x9] sm:$0xff]
  %v65 = vld [vmem:[#allocation2 + $0x21] sm:$0xff]
  %v66 = vld [vmem:[#allocation2 + $0x29] sm:$0xff]
  %v67 = vlaneseq
  %v68 = vshrl.u32 %v67, 7
  %v69 = vsub.s32 1, %v68
  %v70 = vrot.slane %v29, %v69
  %v71 = vmul.f32 %v63, %v70
  %v72 = vmul.f32 %v64, %v70
  %v73 = vmul.f32 %v65, %v70
  %v74 = vmul.f32 %v66, %v70
  %v75 = vadd.f32 %v47, %v71
  %v76 = vadd.f32 %v48, %v72
  %v77 = vadd.f32 %v49, %v73
  %v78 = vadd.f32 %v50, %v74
  %v79 = vlaneseq
  %v80 = vshrl.u32 %v79, 7
  %v81 = vsub.s32 1, %v80
  %v82 = vrot.slane %v32, %v81
  %v83 = vmul.f32 %v63, %v82
  %v84 = vmul.f32 %v64, %v82
  %v85 = vmul.f32 %v65, %v82
  %v86 = vmul.f32 %v66, %v82
  %v87 = vadd.f32 %v59, %v83
  %v88 = vadd.f32 %v60, %v84
  %v89 = vadd.f32 %v61, %v85
  %v90 = vadd.f32 %v62, %v86
  %v91 = vld [vmem:[#allocation2 + $0x2] sm:$0xff]
  %v92 = vld [vmem:[#allocation2 + $0xa] sm:$0xff]
  %v93 = vld [vmem:[#allocation2 + $0x22] sm:$0xff]
  %v94 = vld [vmem:[#allocation2 + $0x2a] sm:$0xff]
  %v95 = vlaneseq
  %v96 = vshrl.u32 %v95, 7
  %v97 = vsub.s32 2, %v96
  %v98 = vrot.slane %v29, %v97
  %v99 = vmul.f32 %v91, %v98
  %v100 = vmul.f32 %v92, %v98
  %v101 = vmul.f32 %v93, %v98
  %v102 = vmul.f32 %v94, %v98
  %v103 = vadd.f32 %v75, %v99
  %v104 = vadd.f32 %v76, %v100
  %v105 = vadd.f32 %v77, %v101
  %v106 = vadd.f32 %v78, %v102
  %v107 = vlaneseq
  %v108 = vshrl.u32 %v107, 7
  %v109 = vsub.s32 2, %v108
  %v110 = vrot.slane %v32, %v109
  %v111 = vmul.f32 %v91, %v110
  %v112 = vmul.f32 %v92, %v110
  %v113 = vmul.f32 %v93, %v110
  %v114 = vmul.f32 %v94, %v110
  %v115 = vadd.f32 %v87, %v111
  %v116 = vadd.f32 %v88, %v112
  %v117 = vadd.f32 %v89, %v113
  %v118 = vadd.f32 %v90, %v114
  %v119 = vld [vmem:[#allocation2 + $0x3] sm:$0xff]
  %v120 = vld [vmem:[#allocation2 + $0xb] sm:$0xff]
  %v121 = vld [vmem:[#allocation2 + $0x23] sm:$0xff]
  %v122 = vld [vmem:[#allocation2 + $0x2b] sm:$0xff]
  %v123 = vlaneseq
  %v124 = vshrl.u32 %v123, 7
  %v125 = vsub.s32 3, %v124
  %v126 = vrot.slane %v29, %v125
  %v127 = vmul.f32 %v119, %v126
  %v128 = vmul.f32 %v120, %v126
  %v129 = vmul.f32 %v121, %v126
  %v130 = vmul.f32 %v122, %v126
  %v131 = vadd.f32 %v103, %v127
  %v132 = vadd.f32 %v104, %v128
  %v133 = vadd.f32 %v105, %v129
  %v134 = vadd.f32 %v106, %v130
  %v135 = vlaneseq
  %v136 = vshrl.u32 %v135, 7
  %v137 = vsub.s32 3, %v136
  %v138 = vrot.slane %v32, %v137
  %v139 = vmul.f32 %v119, %v138
  %v140 = vmul.f32 %v120, %v138
  %v141 = vmul.f32 %v121, %v138
  %v142 = vmul.f32 %v122, %v138
  %v143 = vadd.f32 %v115, %v139
  %v144 = vadd.f32 %v116, %v140
  %v145 = vadd.f32 %v117, %v141
  %v146 = vadd.f32 %v118, %v142
  %v147 = vld [vmem:[#allocation2 + $0x4] sm:$0xff]
  %v148 = vld [vmem:[#allocation2 + $0xc] sm:$0xff]
  %v149 = vld [vmem:[#allocation2 + $0x24] sm:$0xff]
  %v150 = vld [vmem:[#allocation2 + $0x2c] sm:$0xff]
  %v151 = vlaneseq
  %v152 = vshrl.u32 %v151, 7
  %v153 = vsub.s32 4, %v152
  %v154 = vrot.slane %v29, %v153
  %v155 = vmul.f32 %v147, %v154
  %v156 = vmul.f32 %v148, %v154
  %v157 = vmul.f32 %v149, %v154
  %v158 = vmul.f32 %v150, %v154
  %v159 = vadd.f32 %v131, %v155
  %v160 = vadd.f32 %v132, %v156
  %v161 = vadd.f32 %v133, %v157
  %v162 = vadd.f32 %v134, %v158
  %v163 = vlaneseq
  %v164 = vshrl.u32 %v163, 7
  %v165 = vsub.s32 4, %v164
  %v166 = vrot.slane %v32, %v165
  %v167 = vmul.f32 %v147, %v166
  %v168 = vmul.f32 %v148, %v166
  %v169 = vmul.f32 %v149, %v166
  %v170 = vmul.f32 %v150, %v166
  %v171 = vadd.f32 %v143, %v167
  %v172 = vadd.f32 %v144, %v168
  %v173 = vadd.f32 %v145, %v169
  %v174 = vadd.f32 %v146, %v170
  %v175 = vld [vmem:[#allocation2 + $0x5] sm:$0xff]
  %v176 = vld [vmem:[#allocation2 + $0xd] sm:$0xff]
  %v177 = vld [vmem:[#allocation2 + $0x25] sm:$0xff]
  %v178 = vld [vmem:[#allocation2 + $0x2d] sm:$0xff]
  %v179 = vlaneseq
  %v180 = vshrl.u32 %v179, 7
  %v181 = vsub.s32 5, %v180
  %v182 = vrot.slane %v29, %v181
  %v183 = vmul.f32 %v175, %v182
  %v184 = vmul.f32 %v176, %v182
  %v185 = vmul.f32 %v177, %v182
  %v186 = vmul.f32 %v178, %v182
  %v187 = vadd.f32 %v159, %v183
  %v188 = vadd.f32 %v160, %v184
  %v189 = vadd.f32 %v161, %v185
  %v190 = vadd.f32 %v162, %v186
  %v191 = vlaneseq
  %v192 = vshrl.u32 %v191, 7
  %v193 = vsub.s32 5, %v192
  %v194 = vrot.slane %v32, %v193
  %v195 = vmul.f32 %v175, %v194
  %v196 = vmul.f32 %v176, %v194
  %v197 = vmul.f32 %v177, %v194
  %v198 = vmul.f32 %v178, %v194
  %v199 = vadd.f32 %v171, %v195
  %v200 = vadd.f32 %v172, %v196
  %v201 = vadd.f32 %v173, %v197
  %v202 = vadd.f32 %v174, %v198
  %v203 = vld [vmem:[#allocation2 + $0x6] sm:$0xff]
  %v204 = vld [vmem:[#allocation2 + $0xe] sm:$0xff]
  %v205 = vld [vmem:[#allocation2 + $0x26] sm:$0xff]
  %v206 = vld [vmem:[#allocation2 + $0x2e] sm:$0xff]
  %v207 = vlaneseq
  %v208 = vshrl.u32 %v207, 7
  %v209 = vsub.s32 6, %v208
  %v210 = vrot.slane %v29, %v209
  %v211 = vmul.f32 %v203, %v210
  %v212 = vmul.f32 %v204, %v210
  %v213 = vmul.f32 %v205, %v210
  %v214 = vmul.f32 %v206, %v210
  %v215 = vadd.f32 %v187, %v211
  %v216 = vadd.f32 %v188, %v212
  %v217 = vadd.f32 %v189, %v213
  %v218 = vadd.f32 %v190, %v214
  %v219 = vlaneseq
  %v220 = vshrl.u32 %v219, 7
  %v221 = vsub.s32 6, %v220
  %v222 = vrot.slane %v32, %v221
  %v223 = vmul.f32 %v203, %v222
  %v224 = vmul.f32 %v204, %v222
  %v225 = vmul.f32 %v205, %v222
  %v226 = vmul.f32 %v206, %v222
  %v227 = vadd.f32 %v199, %v223
  %v228 = vadd.f32 %v200, %v224
  %v229 = vadd.f32 %v201, %v225
  %v230 = vadd.f32 %v202, %v226
  %v231 = vld [vmem:[#allocation2 + $0x7] sm:$0xff]
  %v232 = vld [vmem:[#allocation2 + $0xf] sm:$0xff]
  %v233 = vld [vmem:[#allocation2 + $0x27] sm:$0xff]
  %v234 = vld [vmem:[#allocation2 + $0x2f] sm:$0xff]
  %v235 = vlaneseq
  %v236 = vshrl.u32 %v235, 7
  %v237 = vsub.s32 7, %v236
  %v238 = vrot.slane %v29, %v237
  %v239 = vmul.f32 %v231, %v238
  %v240 = vmul.f32 %v232, %v238
  %v241 = vmul.f32 %v233, %v238
  %v242 = vmul.f32 %v234, %v238
  %v243 = vadd.f32 %v215, %v239
  %v244 = vadd.f32 %v216, %v240
  %v245 = vadd.f32 %v217, %v241
  %v246 = vadd.f32 %v218, %v242
  %v247 = vlaneseq
  %v248 = vshrl.u32 %v247, 7
  %v249 = vsub.s32 7, %v248
  %v250 = vrot.slane %v32, %v249
  %v251 = vmul.f32 %v231, %v250
  %v252 = vmul.f32 %v232, %v250
  %v253 = vmul.f32 %v233, %v250
  %v254 = vmul.f32 %v234, %v250
  %v255 = vadd.f32 %v227, %v251
  %v256 = vadd.f32 %v228, %v252
  %v257 = vadd.f32 %v229, %v253
  %v258 = vadd.f32 %v230, %v254
  %v259 = vld [vmem:[#allocation2 + $0x10] sm:$0xff]
  %v260 = vld [vmem:[#allocation2 + $0x30] sm:$0xff]
  %v261 = vlaneseq
  %v262 = vshrl.u32 %v261, 7
  %v263 = vsub.s32 0, %v262
  %v264 = vrot.slane %v30, %v263
  %v265 = vmul.f32 %v36, %v264
  %v266 = vmul.f32 %v259, %v264
  %v267 = vmul.f32 %v38, %v264
  %v268 = vmul.f32 %v260, %v264
  %v269 = vadd.f32 %v243, %v265
  %v270 = vadd.f32 %v244, %v266
  %v271 = vadd.f32 %v245, %v267
  %v272 = vadd.f32 %v246, %v268
  %v273 = vlaneseq
  %v274 = vshrl.u32 %v273, 7
  %v275 = vsub.s32 0, %v274
  %v276 = vrot.slane %v33, %v275
  %v277 = vmul.f32 %v36, %v276
  %v278 = vmul.f32 %v259, %v276
  %v279 = vmul.f32 %v38, %v276
  %v280 = vmul.f32 %v260, %v276
  %v281 = vadd.f32 %v255, %v277
  %v282 = vadd.f32 %v256, %v278
  %v283 = vadd.f32 %v257, %v279
  %v284 = vadd.f32 %v258, %v280
  %v285 = vld [vmem:[#allocation2 + $0x11] sm:$0xff]
  %v286 = vld [vmem:[#allocation2 + $0x31] sm:$0xff]
  %v287 = vlaneseq
  %v288 = vshrl.u32 %v287, 7
  %v289 = vsub.s32 1, %v288
  %v290 = vrot.slane %v30, %v289
  %v291 = vmul.f32 %v64, %v290
  %v292 = vmul.f32 %v285, %v290
  %v293 = vmul.f32 %v66, %v290
  %v294 = vmul.f32 %v286, %v290
  %v295 = vadd.f32 %v269, %v291
  %v296 = vadd.f32 %v270, %v292
  %v297 = vadd.f32 %v271, %v293
  %v298 = vadd.f32 %v272, %v294
  %v299 = vlaneseq
  %v300 = vshrl.u32 %v299, 7
  %v301 = vsub.s32 1, %v300
  %v302 = vrot.slane %v33, %v301
  %v303 = vmul.f32 %v64, %v302
  %v304 = vmul.f32 %v285, %v302
  %v305 = vmul.f32 %v66, %v302
  %v306 = vmul.f32 %v286, %v302
  %v307 = vadd.f32 %v281, %v303
  %v308 = vadd.f32 %v282, %v304
  %v309 = vadd.f32 %v283, %v305
  %v310 = vadd.f32 %v284, %v306
  %v311 = vld [vmem:[#allocation2 + $0x12] sm:$0xff]
  %v312 = vld [vmem:[#allocation2 + $0x32] sm:$0xff]
  %v313 = vlaneseq
  %v314 = vshrl.u32 %v313, 7
  %v315 = vsub.s32 2, %v314
  %v316 = vrot.slane %v30, %v315
  %v317 = vmul.f32 %v92, %v316
  %v318 = vmul.f32 %v311, %v316
  %v319 = vmul.f32 %v94, %v316
  %v320 = vmul.f32 %v312, %v316
  %v321 = vadd.f32 %v295, %v317
  %v322 = vadd.f32 %v296, %v318
  %v323 = vadd.f32 %v297, %v319
  %v324 = vadd.f32 %v298, %v320
  %v325 = vlaneseq
  %v326 = vshrl.u32 %v325, 7
  %v327 = vsub.s32 2, %v326
  %v328 = vrot.slane %v33, %v327
  %v329 = vmul.f32 %v92, %v328
  %v330 = vmul.f32 %v311, %v328
  %v331 = vmul.f32 %v94, %v328
  %v332 = vmul.f32 %v312, %v328
  %v333 = vadd.f32 %v307, %v329
  %v334 = vadd.f32 %v308, %v330
  %v335 = vadd.f32 %v309, %v331
  %v336 = vadd.f32 %v310, %v332
  %v337 = vld [vmem:[#allocation2 + $0x13] sm:$0xff]
  %v338 = vld [vmem:[#allocation2 + $0x33] sm:$0xff]
  %v339 = vlaneseq
  %v340 = vshrl.u32 %v339, 7
  %v341 = vsub.s32 3, %v340
  %v342 = vrot.slane %v30, %v341
  %v343 = vmul.f32 %v120, %v342
  %v344 = vmul.f32 %v337, %v342
  %v345 = vmul.f32 %v122, %v342
  %v346 = vmul.f32 %v338, %v342
  %v347 = vadd.f32 %v321, %v343
  %v348 = vadd.f32 %v322, %v344
  %v349 = vadd.f32 %v323, %v345
  %v350 = vadd.f32 %v324, %v346
  %v351 = vlaneseq
  %v352 = vshrl.u32 %v351, 7
  %v353 = vsub.s32 3, %v352
  %v354 = vrot.slane %v33, %v353
  %v355 = vmul.f32 %v120, %v354
  %v356 = vmul.f32 %v337, %v354
  %v357 = vmul.f32 %v122, %v354
  %v358 = vmul.f32 %v338, %v354
  %v359 = vadd.f32 %v333, %v355
  %v360 = vadd.f32 %v334, %v356
  %v361 = vadd.f32 %v335, %v357
  %v362 = vadd.f32 %v336, %v358
  %v363 = vld [vmem:[#allocation2 + $0x14] sm:$0xff]
  %v364 = vld [vmem:[#allocation2 + $0x34] sm:$0xff]
  %v365 = vlaneseq
  %v366 = vshrl.u32 %v365, 7
  %v367 = vsub.s32 4, %v366
  %v368 = vrot.slane %v30, %v367
  %v369 = vmul.f32 %v148, %v368
  %v370 = vmul.f32 %v363, %v368
  %v371 = vmul.f32 %v150, %v368
  %v372 = vmul.f32 %v364, %v368
  %v373 = vadd.f32 %v347, %v369
  %v374 = vadd.f32 %v348, %v370
  %v375 = vadd.f32 %v349, %v371
  %v376 = vadd.f32 %v350, %v372
  %v377 = vlaneseq
  %v378 = vshrl.u32 %v377, 7
  %v379 = vsub.s32 4, %v378
  %v380 = vrot.slane %v33, %v379
  %v381 = vmul.f32 %v148, %v380
  %v382 = vmul.f32 %v363, %v380
  %v383 = vmul.f32 %v150, %v380
  %v384 = vmul.f32 %v364, %v380
  %v385 = vadd.f32 %v359, %v381
  %v386 = vadd.f32 %v360, %v382
  %v387 = vadd.f32 %v361, %v383
  %v388 = vadd.f32 %v362, %v384
  %v389 = vld [vmem:[#allocation2 + $0x15] sm:$0xff]
  %v390 = vld [vmem:[#allocation2 + $0x35] sm:$0xff]
  %v391 = vlaneseq
  %v392 = vshrl.u32 %v391, 7
  %v393 = vsub.s32 5, %v392
  %v394 = vrot.slane %v30, %v393
  %v395 = vmul.f32 %v176, %v394
  %v396 = vmul.f32 %v389, %v394
  %v397 = vmul.f32 %v178, %v394
  %v398 = vmul.f32 %v390, %v394
  %v399 = vadd.f32 %v373, %v395
  %v400 = vadd.f32 %v374, %v396
  %v401 = vadd.f32 %v375, %v397
  %v402 = vadd.f32 %v376, %v398
  %v403 = vlaneseq
  %v404 = vshrl.u32 %v403, 7
  %v405 = vsub.s32 5, %v404
  %v406 = vrot.slane %v33, %v405
  %v407 = vmul.f32 %v176, %v406
  %v408 = vmul.f32 %v389, %v406
  %v409 = vmul.f32 %v178, %v406
  %v410 = vmul.f32 %v390, %v406
  %v411 = vadd.f32 %v385, %v407
  %v412 = vadd.f32 %v386, %v408
  %v413 = vadd.f32 %v387, %v409
  %v414 = vadd.f32 %v388, %v410
  %v415 = vld [vmem:[#allocation2 + $0x16] sm:$0xff]
  %v416 = vld [vmem:[#allocation2 + $0x36] sm:$0xff]
  %v417 = vlaneseq
  %v418 = vshrl.u32 %v417, 7
  %v419 = vsub.s32 6, %v418
  %v420 = vrot.slane %v30, %v419
  %v421 = vmul.f32 %v204, %v420
  %v422 = vmul.f32 %v415, %v420
  %v423 = vmul.f32 %v206, %v420
  %v424 = vmul.f32 %v416, %v420
  %v425 = vadd.f32 %v399, %v421
  %v426 = vadd.f32 %v400, %v422
  %v427 = vadd.f32 %v401, %v423
  %v428 = vadd.f32 %v402, %v424
  %v429 = vlaneseq
  %v430 = vshrl.u32 %v429, 7
  %v431 = vsub.s32 6, %v430
  %v432 = vrot.slane %v33, %v431
  %v433 = vmul.f32 %v204, %v432
  %v434 = vmul.f32 %v415, %v432
  %v435 = vmul.f32 %v206, %v432
  %v436 = vmul.f32 %v416, %v432
  %v437 = vadd.f32 %v411, %v433
  %v438 = vadd.f32 %v412, %v434
  %v439 = vadd.f32 %v413, %v435
  %v440 = vadd.f32 %v414, %v436
  %v441 = vld [vmem:[#allocation2 + $0x17] sm:$0xff]
  %v442 = vld [vmem:[#allocation2 + $0x37] sm:$0xff]
  %v443 = vlaneseq
  %v444 = vshrl.u32 %v443, 7
  %v445 = vsub.s32 7, %v444
  %v446 = vrot.slane %v30, %v445
  %v447 = vmul.f32 %v232, %v446
  %v448 = vmul.f32 %v441, %v446
  %v449 = vmul.f32 %v234, %v446
  %v450 = vmul.f32 %v442, %v446
  %v451 = vadd.f32 %v425, %v447
  %v452 = vadd.f32 %v426, %v448
  %v453 = vadd.f32 %v427, %v449
  %v454 = vadd.f32 %v428, %v450
  %v455 = vlaneseq
  %v456 = vshrl.u32 %v455, 7
  %v457 = vsub.s32 7, %v456
  %v458 = vrot.slane %v33, %v457
  %v459 = vmul.f32 %v232, %v458
  %v460 = vmul.f32 %v441, %v458
  %v461 = vmul.f32 %v234, %v458
  %v462 = vmul.f32 %v442, %v458
  %v463 = vadd.f32 %v437, %v459
  %v464 = vadd.f32 %v438, %v460
  %v465 = vadd.f32 %v439, %v461
  %v466 = vadd.f32 %v440, %v462
  %v467 = vld [vmem:[#allocation2 + $0x18] sm:$0xff]
  %v468 = vld [vmem:[#allocation2 + $0x38] sm:$0xff]
  %v469 = vlaneseq
  %v470 = vshrl.u32 %v469, 7
  %v471 = vsub.s32 0, %v470
  %v472 = vrot.slane %v31, %v471
  %v473 = vmul.f32 %v259, %v472
  %v474 = vmul.f32 %v467, %v472
  %v475 = vmul.f32 %v260, %v472
  %v476 = vmul.f32 %v468, %v472
  %v477 = vadd.f32 %v451, %v473
  %v478 = vadd.f32 %v452, %v474
  %v479 = vadd.f32 %v453, %v475
  %v480 = vadd.f32 %v454, %v476
  %v481 = vlaneseq
  %v482 = vshrl.u32 %v481, 7
  %v483 = vsub.s32 0, %v482
  %v484 = vrot.slane %v34, %v483
  %v485 = vmul.f32 %v259, %v484
  %v486 = vmul.f32 %v467, %v484
  %v487 = vmul.f32 %v260, %v484
  %v488 = vmul.f32 %v468, %v484
  %v489 = vadd.f32 %v463, %v485
  %v490 = vadd.f32 %v464, %v486
  %v491 = vadd.f32 %v465, %v487
  %v492 = vadd.f32 %v466, %v488
  %v493 = vmul.f32 %v477, %v477
  %v494 = vmul.f32 %v478, %v478
  %v495 = vmul.f32 %v479, %v479
  %v496 = vmul.f32 %v480, %v480
  %v497 = vmul.f32 %v489, %v489
  %v498 = vmul.f32 %v490, %v490
  %v499 = vmul.f32 %v491, %v491
  %v500 = vmul.f32 %v492, %v492
  %v501 = vadd.f32 %v493, %v497
  %v502 = vadd.f32 %v494, %v498
  %v503 = vadd.f32 %v495, %v499
  %v504 = vadd.f32 %v496, %v500
  %v505 = vmax.f32 %v501, 1e-30
  %v506 = vmax.f32 %v502, 1e-30
  %v507 = vmax.f32 %v503, 1e-30
  %v508 = vmax.f32 %v504, 1e-30
  %v509 = vrsqrt.pop %v505
  %v510 = vrsqrt.pop %v506
  %v511 = vrsqrt.pop %v507
  %v512 = vrsqrt.pop %v508
  %v513 = vmul.f32 %v501, %v509
  %v514 = vmul.f32 %v502, %v510
  %v515 = vmul.f32 %v503, %v511
  %v516 = vmul.f32 %v504, %v512
  %v517 = vand.u32 2147483647, %v477
  %v518 = vand.u32 2147483647, %v489
  %v519 = vmin.f32 %v517, %v518
  %v520 = vmax.f32 %v517, %v518
  %v521 = vrcp.pop %v520
  %v522 = vmul.f32 %v519, %v521
  %v523 = vmul.f32 %v522, %v522
  %v524 = vmul.f32 0.002785687, %v523
  %v525 = vadd.f32 %v524, -0.015866
  %v526 = vmul.f32 %v525, %v523
  %v527 = vadd.f32 %v526, 0.04247222
  %v528 = vmul.f32 %v527, %v523
  %v529 = vadd.f32 %v528, -0.074975304
  %v530 = vmul.f32 %v529, %v523
  %v531 = vadd.f32 %v530, 0.1064488
  %v532 = vmul.f32 %v531, %v523
  %v533 = vadd.f32 %v532, -0.14207031
  %v534 = vmul.f32 %v533, %v523
  %v535 = vadd.f32 %v534, 0.19993454
  %v536 = vmul.f32 %v535, %v523
  %v537 = vadd.f32 %v536, -0.33333147
  %v538 = vmul.f32 %v537, %v523
  %v539 = vmul.f32 %v538, %v522
  %v540 = vadd.f32 %v539, %v522
  %vm541 = vcmp.gt.f32.partialorder %v518, %v517
  %v542 = vsub.f32 1.5707964, %v540
  %v543 = vsel %vm541, %v542, %v540
  %vm544 = vcmp.lt.f32.partialorder %v477, 0.0
  %v545 = vsub.f32 3.1415927, %v543
  %v546 = vsel %vm544, %v545, %v543
  %vm547 = vcmp.lt.s32.totalorder %v477, 0
  %v548 = vsel %vm547, 3.1415927, 0.0
  %vm549 = vcmp.eq.f32.partialorder %v489, 0.0
  %v550 = vsel %vm549, %v548, %v546
  %vm551 = vcmp.ne.f32.partialorder %v477, %v477
  %vm552 = vcmp.ne.f32.partialorder %v489, %v489
  %vm553 = vmor %vm551, %vm552
  %v554 = vsel %vm553, nan, %v550
  %vm555 = vcmp.lt.f32.partialorder %v477, 0.0
  %v556 = vsel %vm555, 2.3561945, 0.7853982
  %vm557 = vcmp.eq.s32.totalorder %v517, inf
  %vm558 = vcmp.eq.s32.totalorder %v518, inf
  %vm559 = vmand %vm557, %vm558
  %v560 = vsel %vm559, %v556, %v554
  %v561 = vand.u32 2147483647, %v560
  %v562 = vand.u32 %v489, 2147483648
  %v563 = vor.u32 %v561, %v562
  %v564 = vand.u32 2147483647, %v478
  %v565 = vand.u32 2147483647, %v490
  %v566 = vmin.f32 %v564, %v565
  %v567 = vmax.f32 %v564, %v565
  %v568 = vrcp.pop %v567
  %v569 = vmul.f32 %v566, %v568
  %v570 = vmul.f32 %v569, %v569
  %v571 = vmul.f32 0.002785687, %v570
  %v572 = vadd.f32 %v571, -0.015866
  %v573 = vmul.f32 %v572, %v570
  %v574 = vadd.f32 %v573, 0.04247222
  %v575 = vmul.f32 %v574, %v570
  %v576 = vadd.f32 %v575, -0.074975304
  %v577 = vmul.f32 %v576, %v570
  %v578 = vadd.f32 %v577, 0.1064488
  %v579 = vmul.f32 %v578, %v570
  %v580 = vadd.f32 %v579, -0.14207031
  %v581 = vmul.f32 %v580, %v570
  %v582 = vadd.f32 %v581, 0.19993454
  %v583 = vmul.f32 %v582, %v570
  %v584 = vadd.f32 %v583, -0.33333147
  %v585 = vmul.f32 %v584, %v570
  %v586 = vmul.f32 %v585, %v569
  %v587 = vadd.f32 %v586, %v569
  %vm588 = vcmp.gt.f32.partialorder %v565, %v564
  %v589 = vsub.f32 1.5707964, %v587
  %v590 = vsel %vm588, %v589, %v587
  %vm591 = vcmp.lt.f32.partialorder %v478, 0.0
  %v592 = vsub.f32 3.1415927, %v590
  %v593 = vsel %vm591, %v592, %v590
  %vm594 = vcmp.lt.s32.totalorder %v478, 0
  %v595 = vsel %vm594, 3.1415927, 0.0
  %vm596 = vcmp.eq.f32.partialorder %v490, 0.0
  %v597 = vsel %vm596, %v595, %v593
  %vm598 = vcmp.ne.f32.partialorder %v478, %v478
  %vm599 = vcmp.ne.f32.partialorder %v490, %v490
  %vm600 = vmor %vm598, %vm599
  %v601 = vsel %vm600, nan, %v597
  %vm602 = vcmp.lt.f32.partialorder %v478, 0.0
  %v603 = vsel %vm602, 2.3561945, 0.7853982
  %vm604 = vcmp.eq.s32.totalorder %v564, inf
  %vm605 = vcmp.eq.s32.totalorder %v565, inf
  %vm606 = vmand %vm604, %vm605
  %v607 = vsel %vm606, %v603, %v601
  %v608 = vand.u32 2147483647, %v607
  %v609 = vand.u32 %v490, 2147483648
  %v610 = vor.u32 %v608, %v609
  %v611 = vand.u32 2147483647, %v479
  %v612 = vand.u32 2147483647, %v491
  %v613 = vmin.f32 %v611, %v612
  %v614 = vmax.f32 %v611, %v612
  %v615 = vrcp.pop %v614
  %v616 = vmul.f32 %v613, %v615
  %v617 = vmul.f32 %v616, %v616
  %v618 = vmul.f32 0.002785687, %v617
  %v619 = vadd.f32 %v618, -0.015866
  %v620 = vmul.f32 %v619, %v617
  %v621 = vadd.f32 %v620, 0.04247222
  %v622 = vmul.f32 %v621, %v617
  %v623 = vadd.f32 %v622, -0.074975304
  %v624 = vmul.f32 %v623, %v617
  %v625 = vadd.f32 %v624, 0.1064488
  %v626 = vmul.f32 %v625, %v617
  %v627 = vadd.f32 %v626, -0.14207031
  %v628 = vmul.f32 %v627, %v617
  %v629 = vadd.f32 %v628, 0.19993454
  %v630 = vmul.f32 %v629, %v617
  %v631 = vadd.f32 %v630, -0.33333147
  %v632 = vmul.f32 %v631, %v617
  %v633 = vmul.f32 %v632, %v616
  %v634 = vadd.f32 %v633, %v616
  %vm635 = vcmp.gt.f32.partialorder %v612, %v611
  %v636 = vsub.f32 1.5707964, %v634
  %v637 = vsel %vm635, %v636, %v634
  %vm638 = vcmp.lt.f32.partialorder %v479, 0.0
  %v639 = vsub.f32 3.1415927, %v637
  %v640 = vsel %vm638, %v639, %v637
  %vm641 = vcmp.lt.s32.totalorder %v479, 0
  %v642 = vsel %vm641, 3.1415927, 0.0
  %vm643 = vcmp.eq.f32.partialorder %v491, 0.0
  %v644 = vsel %vm643, %v642, %v640
  %vm645 = vcmp.ne.f32.partialorder %v479, %v479
  %vm646 = vcmp.ne.f32.partialorder %v491, %v491
  %vm647 = vmor %vm645, %vm646
  %v648 = vsel %vm647, nan, %v644
  %vm649 = vcmp.lt.f32.partialorder %v479, 0.0
  %v650 = vsel %vm649, 2.3561945, 0.7853982
  %vm651 = vcmp.eq.s32.totalorder %v611, inf
  %vm652 = vcmp.eq.s32.totalorder %v612, inf
  %vm653 = vmand %vm651, %vm652
  %v654 = vsel %vm653, %v650, %v648
  %v655 = vand.u32 2147483647, %v654
  %v656 = vand.u32 %v491, 2147483648
  %v657 = vor.u32 %v655, %v656
  %v658 = vand.u32 2147483647, %v480
  %v659 = vand.u32 2147483647, %v492
  %v660 = vmin.f32 %v658, %v659
  %v661 = vmax.f32 %v658, %v659
  %v662 = vrcp.pop %v661
  %v663 = vmul.f32 %v660, %v662
  %v664 = vmul.f32 %v663, %v663
  %v665 = vmul.f32 0.002785687, %v664
  %v666 = vadd.f32 %v665, -0.015866
  %v667 = vmul.f32 %v666, %v664
  %v668 = vadd.f32 %v667, 0.04247222
  %v669 = vmul.f32 %v668, %v664
  %v670 = vadd.f32 %v669, -0.074975304
  %v671 = vmul.f32 %v670, %v664
  %v672 = vadd.f32 %v671, 0.1064488
  %v673 = vmul.f32 %v672, %v664
  %v674 = vadd.f32 %v673, -0.14207031
  %v675 = vmul.f32 %v674, %v664
  %v676 = vadd.f32 %v675, 0.19993454
  %v677 = vmul.f32 %v676, %v664
  %v678 = vadd.f32 %v677, -0.33333147
  %v679 = vmul.f32 %v678, %v664
  %v680 = vmul.f32 %v679, %v663
  %v681 = vadd.f32 %v680, %v663
  %vm682 = vcmp.gt.f32.partialorder %v659, %v658
  %v683 = vsub.f32 1.5707964, %v681
  %v684 = vsel %vm682, %v683, %v681
  %vm685 = vcmp.lt.f32.partialorder %v480, 0.0
  %v686 = vsub.f32 3.1415927, %v684
  %v687 = vsel %vm685, %v686, %v684
  %vm688 = vcmp.lt.s32.totalorder %v480, 0
  %v689 = vsel %vm688, 3.1415927, 0.0
  %vm690 = vcmp.eq.f32.partialorder %v492, 0.0
  %v691 = vsel %vm690, %v689, %v687
  %vm692 = vcmp.ne.f32.partialorder %v480, %v480
  %vm693 = vcmp.ne.f32.partialorder %v492, %v492
  %vm694 = vmor %vm692, %vm693
  %v695 = vsel %vm694, nan, %v691
  %vm696 = vcmp.lt.f32.partialorder %v480, 0.0
  %v697 = vsel %vm696, 2.3561945, 0.7853982
  %vm698 = vcmp.eq.s32.totalorder %v658, inf
  %vm699 = vcmp.eq.s32.totalorder %v659, inf
  %vm700 = vmand %vm698, %vm699
  %v701 = vsel %vm700, %v697, %v695
  %v702 = vand.u32 2147483647, %v701
  %v703 = vand.u32 %v492, 2147483648
  %v704 = vor.u32 %v702, %v703
  %v705 = vsel %vm16, %v513, 0.0
  %v706 = vsel %vm16, %v514, 0.0
  %v707 = vadd.f32 %v705, %v706
  %v708 = vsel %vm16, %v515, 0.0
  %v709 = vadd.f32 %v707, %v708
  %v710 = vsel %vm16, %v516, 0.0
  %v711 = vadd.f32 %v709, %v710
  %v712 = vrot.slane %v711, 4
  %v713 = vadd.f32 %v711, %v712
  %v714 = vrot.slane %v713, 2
  %v715 = vadd.f32 %v713, %v714
  %v716 = vrot.slane %v715, 1
  %v717 = vadd.f32 %v715, %v716
  %v718 = vmul.f32 %v717, 0.03125
  %v719 = vmul.f32 %v513, %v513
  %v720 = vmul.f32 %v514, %v514
  %v721 = vmul.f32 %v515, %v515
  %v722 = vmul.f32 %v516, %v516
  %v723 = vsel %vm16, %v719, 0.0
  %v724 = vsel %vm16, %v720, 0.0
  %v725 = vadd.f32 %v723, %v724
  %v726 = vsel %vm16, %v721, 0.0
  %v727 = vadd.f32 %v725, %v726
  %v728 = vsel %vm16, %v722, 0.0
  %v729 = vadd.f32 %v727, %v728
  %v730 = vrot.slane %v729, 4
  %v731 = vadd.f32 %v729, %v730
  %v732 = vrot.slane %v731, 2
  %v733 = vadd.f32 %v731, %v732
  %v734 = vrot.slane %v733, 1
  %v735 = vadd.f32 %v733, %v734
  %v736 = vmul.f32 %v735, 0.03125
  %v737 = vmul.f32 %v718, %v718
  %v738 = vsub.f32 %v736, %v737
  %v739 = vsub.f32 %v513, %v718
  %v740 = vsub.f32 %v514, %v718
  %v741 = vsub.f32 %v515, %v718
  %v742 = vsub.f32 %v516, %v718
  %v743 = vadd.f32 %v738, 1e-05
  %v744 = vrsqrt.pop %v743
  %v745 = vmul.f32 %v739, %v744
  %v746 = vmul.f32 %v740, %v744
  %v747 = vmul.f32 %v741, %v744
  %v748 = vmul.f32 %v742, %v744
  %749 = vst.msk [vmem:[%s3] sm:$0xff] %vm16, %v745
  %750 = vst.msk [vmem:[%s3 + $0x8] sm:$0xff] %vm16, %v746
  %751 = vst.msk [vmem:[%s3 + $0x10] sm:$0xff] %vm16, %v747
  %752 = vst.msk [vmem:[%s3 + $0x18] sm:$0xff] %vm16, %v748
  %v753 = vsel %vm16, %v563, 0.0
  %v754 = vsel %vm16, %v610, 0.0
  %v755 = vadd.f32 %v753, %v754
  %v756 = vsel %vm16, %v657, 0.0
  %v757 = vadd.f32 %v755, %v756
  %v758 = vsel %vm16, %v704, 0.0
  %v759 = vadd.f32 %v757, %v758
  %v760 = vrot.slane %v759, 4
  %v761 = vadd.f32 %v759, %v760
  %v762 = vrot.slane %v761, 2
  %v763 = vadd.f32 %v761, %v762
  %v764 = vrot.slane %v763, 1
  %v765 = vadd.f32 %v763, %v764
  %v766 = vmul.f32 %v765, 0.03125
  %v767 = vmul.f32 %v563, %v563
  %v768 = vmul.f32 %v610, %v610
  %v769 = vmul.f32 %v657, %v657
  %v770 = vmul.f32 %v704, %v704
  %v771 = vsel %vm16, %v767, 0.0
  %v772 = vsel %vm16, %v768, 0.0
  %v773 = vadd.f32 %v771, %v772
  %v774 = vsel %vm16, %v769, 0.0
  %v775 = vadd.f32 %v773, %v774
  %v776 = vsel %vm16, %v770, 0.0
  %v777 = vadd.f32 %v775, %v776
  %v778 = vrot.slane %v777, 4
  %v779 = vadd.f32 %v777, %v778
  %v780 = vrot.slane %v779, 2
  %v781 = vadd.f32 %v779, %v780
  %v782 = vrot.slane %v781, 1
  %v783 = vadd.f32 %v781, %v782
  %v784 = vmul.f32 %v783, 0.03125
  %v785 = vmul.f32 %v766, %v766
  %v786 = vsub.f32 %v784, %v785
  %v787 = vsub.f32 %v563, %v766
  %v788 = vsub.f32 %v610, %v766
  %v789 = vsub.f32 %v657, %v766
  %v790 = vsub.f32 %v704, %v766
  %v791 = vadd.f32 %v786, 1e-05
  %v792 = vrsqrt.pop %v791
  %v793 = vmul.f32 %v787, %v792
  %v794 = vmul.f32 %v788, %v792
  %v795 = vmul.f32 %v789, %v792
  %v796 = vmul.f32 %v790, %v792
  %797 = vst.msk [vmem:[%s4] sm:$0xff] %vm16, %v793
  %798 = vst.msk [vmem:[%s4 + $0x8] sm:$0xff] %vm16, %v794
  %799 = vst.msk [vmem:[%s4 + $0x10] sm:$0xff] %vm16, %v795
  %800 = vst.msk [vmem:[%s4 + $0x18] sm:$0xff] %vm16, %v796
  // Predicated region
  $region14: #{tpu_custom_call.1} parent=0 // pred_check
    _
  $region15: #{tpu_custom_call.1} parent=0 // pred_check_branch
    %802 = sbr.rel (0) target = $region17
  $region16: #{tpu_custom_call.1} parent=0 // pred_region
    _
  $region17: #{tpu_custom_call.1} parent=0 // pred_fallthru
    _
  // Predicated region
  $region18: #{tpu_custom_call.1} parent=0 // pred_check
    _
  $region19: #{tpu_custom_call.1} parent=0 // pred_check_branch
    %804 = sbr.rel (0) target = $region21
  $region20: #{tpu_custom_call.1} parent=0 // pred_region
    _
  $region21: #{tpu_custom_call.1} parent=0 // pred_fallthru
    _
  // Predicated region
  $region22: #{tpu_custom_call.1} parent=0 // pred_check
    _
  $region23: #{tpu_custom_call.1} parent=0 // pred_check_branch
    %806 = sbr.rel (0) target = $region25
  $region24: #{tpu_custom_call.1} parent=0 // pred_region
    _
  $region25: #{tpu_custom_call.1} parent=0 // pred_fallthru
    _
  // Predicated region
  $region26: #{tpu_custom_call.1} parent=0 // pred_check
    _
  $region27: #{tpu_custom_call.1} parent=0 // pred_check_branch
    %808 = sbr.rel (0) target = $region29
  $region28: #{tpu_custom_call.1} parent=0 // pred_region
    _
  $region29: #{tpu_custom_call.1} parent=0 // pred_fallthru
    _

</llo_original>
